<compile_context>
chip_gen: v7x
topology: tpu7x:2x2x1
jax: 0.10.0
libtpu: 0.0.40
codegen_flags: <defaults>
</compile_context>

<pallas_src>
import functools

import jax
import jax.numpy as jnp
from jax.experimental import pallas as pl
from jax.experimental.pallas import tpu as pltpu

LANES = 128
SUBLANES = 8
ROW_TILE = 8192                      # rows/grid step -> 4 MiB f32 per input tile
VMEM_LIMIT_BYTES = 40 * 1024 * 1024  # explicit: covers v5e's 16 MiB default, < v7x 64 MiB
TINY_N = SUBLANES * LANES            # below this, use plain jnp (fast path)


def _rmse_partial_kernel(yh_ref, y_ref, o_ref, *, tile_rows, valid_rows, needs_mask):
    # Zero this split's lane-partial accumulator on its first step.  The output block
    # index is constant along the step axis, so the block stays resident in VMEM and
    # acts as the accumulator (no scratch needed).
    @pl.when(pl.program_id(1) == 0)
    def _():
        o_ref[...] = jnp.zeros_like(o_ref)

    d = yh_ref[...].astype(jnp.float32) - y_ref[...].astype(jnp.float32)
    dd = d * d

    if needs_mask:
        # Row-granularity validity: compare a grid-invariant (tile,1) iota against a
        # per-step scalar threshold.  Overflow (duplicated clamped) blocks get a
        # negative threshold and are fully masked.  Must remain a select (not a
        # multiply): OOB rows of a ragged block hold unspecified bits.
        blk = pl.program_id(0) * pl.num_programs(1) + pl.program_id(1)
        thr = valid_rows - blk * tile_rows
        row_idx = jax.lax.broadcasted_iota(jnp.int32, (tile_rows, 1), 0)
        dd = jnp.where(row_idx < thr, dd, 0.0)

    # Pure-VPU partial reduction: each (8,128) slab is one f32 vreg; summing the slab
    # axis is a chain of vector adds into the resident accumulator.
    psum = jnp.sum(dd.reshape(tile_rows // SUBLANES, SUBLANES, LANES), axis=0)
    o_ref[...] += psum.reshape(1, SUBLANES, LANES)


def rmse_loss(y_hat, y, *, row_tile=ROW_TILE):
    assert y_hat.shape == y.shape, "y_hat and y must have the same shape"
    assert row_tile % SUBLANES == 0
    total_n = y_hat.size
    if total_n == 0:
        return jnp.float32(jnp.nan)  # matches torch: mean over empty -> nan

    flat_hat = y_hat.reshape(-1)
    flat_y = y.reshape(-1)

    # Tiny-input fast path: kernel launch overhead dominates below one vreg slab.
    if total_n <= TINY_N:
        d = flat_hat.astype(jnp.float32) - flat_y.astype(jnp.float32)
        return jnp.sqrt(jnp.mean(d * d))

    # Minimal padding:
    #  * multiple of 128            -> zero copies (free reshape), ragged tile masked.
    #  * otherwise                  -> zero-pad to next lane multiple.
    #  * single-tile small inputs   -> also round rows to a sublane multiple so the
    #                                  (tile//8, 8, 128) in-kernel reshape is legal.
    # Padded zeros contribute 0 to the sum; the mean divides by the true total_n.
    if total_n % LANES != 0:
        target = pl.cdiv(total_n, LANES) * LANES
    else:
        target = total_n
    rows = target // LANES
    if rows < row_tile and rows % SUBLANES != 0:
        rows = pl.cdiv(rows, SUBLANES) * SUBLANES
        target = rows * LANES
    pad = target - total_n
    if pad:
        flat_hat = jnp.pad(flat_hat, (0, pad))
        flat_y = jnp.pad(flat_y, (0, pad))

    tile = min(row_tile, rows)          # multiple of 8 by construction
    nblocks = pl.cdiv(rows, tile)

    # 2-way split of the independent row range so megacore can shard it.  Avoid the
    # duplicated overflow block when the block count is small and odd (review item);
    # for large odd counts one masked duplicate tile is negligible traffic.
    if nblocks >= 2 and (nblocks % 2 == 0 or nblocks >= 8):
        splits = 2
    else:
        splits = 1
    steps = pl.cdiv(nblocks, splits)
    has_overflow = splits * steps != nblocks
    needs_mask = (rows % tile != 0) or has_overflow

    if has_overflow:
        def in_map(s, i):
            # Clamp overflow steps onto the last real block; their contribution is
            # masked to zero inside the kernel (negative scalar threshold).
            return (jnp.minimum(s * steps + i, nblocks - 1), 0)
    else:
        def in_map(s, i):
            return (s * steps + i, 0)

    x2 = flat_hat.reshape(rows, LANES)
    y2 = flat_y.reshape(rows, LANES)

    kernel = functools.partial(
        _rmse_partial_kernel,
        tile_rows=tile, valid_rows=rows, needs_mask=needs_mask)

    bytes_accessed = (rows * LANES * (x2.dtype.itemsize + y2.dtype.itemsize)
                      + splits * SUBLANES * LANES * 4)

    partials = pl.pallas_call(
        kernel,
        out_shape=jax.ShapeDtypeStruct((splits, SUBLANES, LANES), jnp.float32),
        grid_spec=pltpu.PrefetchScalarGridSpec(
            num_scalar_prefetch=0,
            grid=(splits, steps),
            in_specs=[
                pl.BlockSpec((tile, LANES), in_map),
                pl.BlockSpec((tile, LANES), in_map),
            ],
            out_specs=pl.BlockSpec((1, SUBLANES, LANES), lambda s, i: (s, 0, 0)),
        ),
        compiler_params=pltpu.CompilerParams(
            dimension_semantics=("parallel", "arbitrary"),
            vmem_limit_bytes=VMEM_LIMIT_BYTES),
        cost_estimate=pl.CostEstimate(
            flops=3 * rows * LANES,
            transcendentals=0,
            bytes_accessed=bytes_accessed),
    )(x2, y2)

    # Tiny epilogue: single cross-lane/sublane reduction + mean + sqrt.
    sse = jnp.sum(partials)
    return jnp.sqrt(sse / jnp.float32(total_n))


def _ref_rmse(a, b):
    d = a.astype(jnp.float32) - b.astype(jnp.float32)
    return jnp.sqrt(jnp.mean(d * d))


if __name__ == "__main__":
    key = jax.random.PRNGKey(0)

    # 1) Small NCHW-like example consistent with the module's forward (kernel path,
    #    single block, no mask, zero padding).
    k1, k2, key = jax.random.split(key, 3)
    shape = (2, 4, 16, 16)
    y_hat = jax.random.normal(k1, shape, dtype=jnp.float32)
    y = jax.random.normal(k2, shape, dtype=jnp.float32)
    loss = rmse_loss(y_hat, y)
    jax.block_until_ready(loss)
    ref = _ref_rmse(y_hat, y)
    assert jnp.allclose(loss, ref, rtol=1e-5, atol=1e-6), (loss, ref)

    # 2) Tiny-input fast path (plain jnp, no pallas_call).
    k1, k2, key = jax.random.split(key, 3)
    a = jax.random.normal(k1, (3, 5), dtype=jnp.float32)
    b = jax.random.normal(k2, (3, 5), dtype=jnp.float32)
    loss_t = rmse_loss(a, b)
    jax.block_until_ready(loss_t)
    assert jnp.allclose(loss_t, _ref_rmse(a, b), rtol=1e-5, atol=1e-6)

    # 3) Non-128-divisible size: minimal pad path, single small tile.
    k1, k2, key = jax.random.split(key, 3)
    a = jax.random.normal(k1, (70, 33), dtype=jnp.float32)
    b = jax.random.normal(k2, (70, 33), dtype=jnp.float32)
    loss_p = rmse_loss(a, b)
    jax.block_until_ready(loss_p)
    assert jnp.allclose(loss_p, _ref_rmse(a, b), rtol=1e-5, atol=1e-6)

    # 4) Ragged last block + 2-way split + duplicated overflow block, exercised with a
    #    small row_tile override so the shapes stay small.
    k1, k2, key = jax.random.split(key, 3)
    a = jax.random.normal(k1, (1028, 128), dtype=jnp.float32)
    b = jax.random.normal(k2, (1028, 128), dtype=jnp.float32)
    loss_r = rmse_loss(a, b, row_tile=64)
    jax.block_until_ready(loss_r)
    assert jnp.allclose(loss_r, _ref_rmse(a, b), rtol=1e-5, atol=1e-6)

    # 5) Production tile config (ROW_TILE=8192): 2 splits, ragged masked last block.
    k1, k2, key = jax.random.split(key, 3)
    a = jax.random.normal(k1, (8196, 128), dtype=jnp.float32)
    b = jax.random.normal(k2, (8196, 128), dtype=jnp.float32)
    loss_b = rmse_loss(a, b)
    jax.block_until_ready(loss_b)
    assert jnp.allclose(loss_b, _ref_rmse(a, b), rtol=1e-4, atol=1e-6)

    print("KERNEL_OK")
</pallas_src>

<mosaic_0001>
module attributes {stable_mosaic.version = 11 : i64} {
  func.func @_rmse_partial_kernel(%arg0: i32, %arg1: i32, %arg2: memref<16x128xf32, #tpu.memory_space<vmem>>, %arg3: memref<16x128xf32, #tpu.memory_space<vmem>>, %arg4: memref<1x8x128xf32, #tpu.memory_space<vmem>>) attributes {dimension_semantics = [#tpu.dimension_semantics<parallel>, #tpu.dimension_semantics<arbitrary>], iteration_bounds = array<i64: 1, 1>, scalar_prefetch = 0 : i64, scratch_operands = 0 : i64, tpu.core_type = #tpu.core_type<tc>, window_params = [{transform_indices = @transform_0, window_bounds = array<i64: 16, 128>}, {transform_indices = @transform_1, window_bounds = array<i64: 16, 128>}, {transform_indices = @transform_2, window_bounds = array<i64: 1, 8, 128>}]} {
    %c0_i32 = arith.constant 0 : i32
    %0 = arith.cmpi eq, %arg1, %c0_i32 : i32
    %1 = arith.extui %0 : i1 to i32
    %c0_i32_0 = arith.constant 0 : i32
    %2 = arith.cmpi ne, %1, %c0_i32_0 : i32
    scf.if %2 {
      %cst_10 = arith.constant 0.000000e+00 : f32
      %13 = vector.broadcast %cst_10 : f32 to vector<1x8x128xf32>
      %c0_11 = arith.constant 0 : index
      %c0_12 = arith.constant 0 : index
      %c0_13 = arith.constant 0 : index
      %14 = vector.load %arg4[%c0_11, %c0_12, %c0_13] : memref<1x8x128xf32, #tpu.memory_space<vmem>>, vector<1x8x128xf32>
      tpu.vector_store %arg4[%c0_11, %c0_12, %c0_13], %13 {strides = array<i32>} : memref<1x8x128xf32, #tpu.memory_space<vmem>>, vector<1x8x128xf32>,
    } else {
    }
    %c0 = arith.constant 0 : index
    %c0_1 = arith.constant 0 : index
    %3 = vector.load %arg2[%c0, %c0_1] : memref<16x128xf32, #tpu.memory_space<vmem>>, vector<16x128xf32>
    %c0_2 = arith.constant 0 : index
    %c0_3 = arith.constant 0 : index
    %4 = vector.load %arg3[%c0_2, %c0_3] : memref<16x128xf32, #tpu.memory_space<vmem>>, vector<16x128xf32>
    %5 = arith.subf %3, %4 : vector<16x128xf32>
    %6 = arith.mulf %5, %5 : vector<16x128xf32>
    %7 = vector.shape_cast %6 : vector<16x128xf32> to vector<2x8x128xf32>
    %cst = arith.constant dense<0.000000e+00> : vector<8x128xf32>
    %8 = vector.multi_reduction <add>, %7, %cst [0] : vector<2x8x128xf32> to vector<8x128xf32>
    %c0_4 = arith.constant 0 : index
    %c0_5 = arith.constant 0 : index
    %c0_6 = arith.constant 0 : index
    %9 = vector.load %arg4[%c0_4, %c0_5, %c0_6] : memref<1x8x128xf32, #tpu.memory_space<vmem>>, vector<1x8x128xf32>
    %10 = vector.shape_cast %8 : vector<8x128xf32> to vector<1x8x128xf32>
    %11 = arith.addf %9, %10 : vector<1x8x128xf32>
    %c0_7 = arith.constant 0 : index
    %c0_8 = arith.constant 0 : index
    %c0_9 = arith.constant 0 : index
    %12 = vector.load %arg4[%c0_7, %c0_8, %c0_9] : memref<1x8x128xf32, #tpu.memory_space<vmem>>, vector<1x8x128xf32>
    tpu.vector_store %arg4[%c0_7, %c0_8, %c0_9], %11 {strides = array<i32>} : memref<1x8x128xf32, #tpu.memory_space<vmem>>, vector<1x8x128xf32>,
    return
  }
  func.func @transform_0(%arg0: i32, %arg1: i32) -> (i32, i32) {
    %c1_i32 = arith.constant 1 : i32
    %0 = arith.muli %arg0, %c1_i32 : i32
    %1 = arith.addi %0, %arg1 : i32
    %c0_i32 = arith.constant 0 : i32
    %c0_i32_0 = arith.constant 0 : i32
    return %1, %c0_i32 : i32, i32
  }
  func.func @transform_1(%arg0: i32, %arg1: i32) -> (i32, i32) {
    %c1_i32 = arith.constant 1 : i32
    %0 = arith.muli %arg0, %c1_i32 : i32
    %1 = arith.addi %0, %arg1 : i32
    %c0_i32 = arith.constant 0 : i32
    %c0_i32_0 = arith.constant 0 : i32
    return %1, %c0_i32 : i32, i32
  }
  func.func @transform_2(%arg0: i32, %arg1: i32) -> (i32, i32, i32) {
    %c0_i32 = arith.constant 0 : i32
    %c0_i32_0 = arith.constant 0 : i32
    %c0_i32_1 = arith.constant 0 : i32
    return %arg0, %c0_i32, %c0_i32_0 : i32, i32, i32
  }
}

</mosaic_0001>

<llo_original>
// kernel: tpu_custom_call.1
$region0: #{tpu_custom_call.1}
  #allocation0 [shape = 'u32[]', space=smem, size = 0x4, offset = 0x4, fixed_abs, tag = 'smem constant byte address 0x4 - core index']
  #allocation1 [shape = 'u32[144,128]{1,0:T(1,128)}', space=vmem, size = 0x12000, scoped, tag = 'internal scratch']
  %s0 = inlined_call_operand.hbm [shape: f32[16,128], index: 0, kind: input, shape index: {}]
  %s1 = inlined_call_operand.hbm [shape: f32[16,128], index: 1, kind: input, shape index: {}]
  %s2 = inlined_call_operand.hbm [shape: f32[1,8,128], index: 2, kind: output, shape index: {}]
  %s3 = sld [smem:[#allocation0]]
  $region30: #{tpu_custom_call.1} parent=0
    _
  %s5 = ssub.s32 1, %s3
  %s6 = scalar_select 0, %s5, %s3
  $region1: #{tpu_custom_call.1} parent=0
    #allocation2 [shape = 'u8[8192]{0}', space=vmem, size = 0x2000, scoped, tag = 'input window, operand 0, single buffered']
    #allocation3 [shape = 's32[1]{0}', space=sflag, size = 0x4, scoped, tag = 'scoped memory for tpu_custom_call.1']
    #allocation4 [shape = 's32[1]{0}', space=sflag, size = 0x4, scoped, tag = 'scoped memory for tpu_custom_call.1']
    #allocation5 [shape = 'u8[8192]{0}', space=vmem, size = 0x2000, scoped, tag = 'input window, operand 1, single buffered']
    #allocation6 [shape = 's32[1]{0}', space=sflag, size = 0x4, scoped, tag = 'scoped memory for tpu_custom_call.1']
    #allocation7 [shape = 'u8[4096]{0}', space=vmem, size = 0x1000, scoped, tag = 'output window, operand 0, single buffered']
    %7 = vsyncpa [#allocation3], 0
    %8 = vsyncpa [#allocation6], 0
    %9 = vsyncpa [#allocation4], 0
    // Predicated region
    $region2: #{tpu_custom_call.1} parent=1 // pred_check
      _
    $region3: #{tpu_custom_call.1} parent=1 // pred_check_branch
      %11 = sbr.rel (0) target = $region5
    $region4: #{tpu_custom_call.1} parent=1 // pred_region
      %s12 = sadd.s32 0, 0
      %s13 = smul.u32 2, %s12
      %s15 = ssub.s32 256, 256
      %16 = vsyncadd [#allocation3], %s15
      %s17 = smul.addr %s13, 128
      %s18 = scalar_lea.hbm %s0, %s17
      %s19 = sshll.u32 [#allocation2], 4
      %s20 = int_to_ptr.vmem [resolvable:$true] %s19
      %25 = dma.hbm_to_vmem [thread:$0]  %s18, 256, %s20, [#allocation3], 128, 128, 8
    $region5: #{tpu_custom_call.1} parent=1 // pred_fallthru
      _
    // Predicated region
    $region6: #{tpu_custom_call.1} parent=1 // pred_check
      _
    $region7: #{tpu_custom_call.1} parent=1 // pred_check_branch
      %27 = sbr.rel (0) target = $region9
    $region8: #{tpu_custom_call.1} parent=1 // pred_region
      %s28 = sadd.s32 0, 0
      %s29 = smul.u32 2, %s28
      %s31 = ssub.s32 256, 256
      %32 = vsyncadd [#allocation6], %s31
      %s33 = smul.addr %s29, 128
      %s34 = scalar_lea.hbm %s1, %s33
      %s35 = sshll.u32 [#allocation5], 4
      %s36 = int_to_ptr.vmem [resolvable:$true] %s35
      %41 = dma.hbm_to_vmem [thread:$0]  %s34, 256, %s36, [#allocation6], 128, 128, 8
    $region9: #{tpu_custom_call.1} parent=1 // pred_fallthru
      _
    // Predicated region
    $region10: #{tpu_custom_call.1} parent=1 // pred_check
      _
    $region11: #{tpu_custom_call.1} parent=1 // pred_check_branch
      %43 = sbr.rel (0) target = $region13
    $region12: #{tpu_custom_call.1} parent=1 // pred_region
      %44 = dma.done [#allocation3], 256
    $region13: #{tpu_custom_call.1} parent=1 // pred_fallthru
      _
    // Predicated region
    $region14: #{tpu_custom_call.1} parent=1 // pred_check
      _
    $region15: #{tpu_custom_call.1} parent=1 // pred_check_branch
      %46 = sbr.rel (0) target = $region17
    $region16: #{tpu_custom_call.1} parent=1 // pred_region
      %47 = dma.done [#allocation6], 256
    $region17: #{tpu_custom_call.1} parent=1 // pred_fallthru
      _
    %s48 = sadd.s32 0, 0
    %s49 = smul.u32 2, %s48
    %s50 = sadd.s32 0, 0
    %s51 = smul.u32 2, %s50
    %p52 = scmp.eq.s32.totalorder 0, 0
    // Predicated region
    $region18: #{tpu_custom_call.1} parent=1 // pred_check
      %p53 = pneg %p52
    $region19: #{tpu_custom_call.1} parent=1 // pred_check_branch
      %55 = sbr.rel (%p53) target = $region21
    $region20: #{tpu_custom_call.1} parent=1 // pred_region
      %56 = vst [vmem:[#allocation7] sm:$0xff] 0.0
    $region21: #{tpu_custom_call.1} parent=1 // pred_fallthru
      _
    %v57 = vld [vmem:[#allocation2] sm:$0xff]
    %v58 = vld [vmem:[#allocation2 + $0x8] sm:$0xff]
    %v59 = vld [vmem:[#allocation5] sm:$0xff]
    %v60 = vld [vmem:[#allocation5 + $0x8] sm:$0xff]
    %v61 = vsub.f32 %v57, %v59
    %v62 = vsub.f32 %v58, %v60
    %v63 = vmul.f32 %v61, %v61
    %v64 = vmul.f32 %v62, %v62
    %v65 = vadd.f32 %v63, %v64
    %v66 = vld [vmem:[#allocation7] sm:$0xff]
    %v67 = vadd.f32 %v66, %v65
    %68 = vst [vmem:[#allocation7] sm:$0xff] %v67
    // Predicated region
    $region22: #{tpu_custom_call.1} parent=1 // pred_check
      _
    $region23: #{tpu_custom_call.1} parent=1 // pred_check_branch
      %70 = sbr.rel (0) target = $region25
    $region24: #{tpu_custom_call.1} parent=1 // pred_region
      %s72 = ssub.s32 128, 128
      %73 = vsyncadd [#allocation4], %s72
      %s75 = sshll.u32 [#allocation7], 4
      %s76 = int_to_ptr.vmem [resolvable:$true] %s75
      %78 = dma.vmem_to_hbm [thread:$0]  %s76, 128, %s2, [#allocation4]
    $region25: #{tpu_custom_call.1} parent=1 // pred_fallthru
      _
    // Predicated region
    $region26: #{tpu_custom_call.1} parent=1 // pred_check
      _
    $region27: #{tpu_custom_call.1} parent=1 // pred_check_branch
      %80 = sbr.rel (0) target = $region29
    $region28: #{tpu_custom_call.1} parent=1 // pred_region
      %81 = dma.done [#allocation4], 128
    $region29: #{tpu_custom_call.1} parent=1 // pred_fallthru
      _
    %82 = vsyncpa [#allocation3], 1
    %83 = vsyncpa [#allocation6], 1
    %84 = vsyncpa [#allocation4], 1

</llo_original>
